<compile_context>
chip_gen: v5e
topology: v5e:2x2
jax: 0.10.0
libtpu: 0.0.40
codegen_flags: <defaults>
</compile_context>

<pallas_src>
import functools

import jax
import jax.numpy as jnp
from jax.experimental import pallas as pl
from jax.experimental.pallas import tpu as pltpu

BN_EPS = 1e-5
LANE = 128


def _round_up(n, m):
    return ((n + m - 1) // m) * m


def _pad2d(a, rows, cols):
    r, c = a.shape
    return jnp.pad(a, ((0, rows - r), (0, cols - c)))


# ----------------------------------------------------------------------------
# Fused kernel: conv-as-matmul + training-mode BatchNorm (+ shortcut + ReLU)
# Grid = (phase, m_tile):
#   phase 0: z = patches @ w ; accumulate per-channel sum / sum-of-squares
#   phase 1: recompute z; y = z*scale + shift (+ shortcut); optional ReLU; store
# ----------------------------------------------------------------------------
def _conv_bn_kernel(*refs, inv_m, relu, shortcut):
    if shortcut == "proj":
        (patches_ref, w_ref, g_ref, be_ref, xsc_ref, wsc_ref, bsc_ref,
         out_ref, sum_ref, ssq_ref) = refs
    elif shortcut == "identity":
        (patches_ref, w_ref, g_ref, be_ref, xsc_ref,
         out_ref, sum_ref, ssq_ref) = refs
    else:
        patches_ref, w_ref, g_ref, be_ref, out_ref, sum_ref, ssq_ref = refs

    p = pl.program_id(0)
    m = pl.program_id(1)

    @pl.when((p == 0) & (m == 0))
    def _init():
        sum_ref[...] = jnp.zeros_like(sum_ref)
        ssq_ref[...] = jnp.zeros_like(ssq_ref)

    # Conv tile as a lane-dense MXU matmul (K and Cout pre-padded to 128).
    # No conv bias: it is cancelled by the BN mean subtraction.
    z = jnp.dot(patches_ref[...], w_ref[...], preferred_element_type=jnp.float32)

    @pl.when(p == 0)
    def _stats():
        sum_ref[...] += jnp.sum(z, axis=0, keepdims=True)
        ssq_ref[...] += jnp.sum(z * z, axis=0, keepdims=True)

    @pl.when(p == 1)
    def _normalize():
        mean = sum_ref[...] * inv_m
        var = jnp.maximum(ssq_ref[...] * inv_m - mean * mean, 0.0)
        scale = g_ref[...] * jax.lax.rsqrt(var + BN_EPS)
        shift = be_ref[...] - mean * scale
        y = z * scale + shift
        if shortcut == "proj":
            # 1x1-conv projection fused into the epilogue (keeps its bias).
            y = y + (jnp.dot(xsc_ref[...], wsc_ref[...],
                             preferred_element_type=jnp.float32) + bsc_ref[...])
        elif shortcut == "identity":
            y = y + xsc_ref[...]
        if relu:
            y = jnp.maximum(y, 0.0)
        out_ref[...] = y


def conv_bn(patches, w, gamma, beta, *, real_m, relu, tile_m,
            shortcut=None, shortcut_operands=()):
    """Fused conv(+BN)(+shortcut)(+relu).

    patches: (M_pad, K_pad) f32, zero-padded rows/cols
    w:       (K_pad, C_pad) f32
    gamma/beta: (1, C_pad) f32 (zero-padded channels)
    shortcut == "identity": shortcut_operands = (xs,)            xs: (M_pad, C_pad)
    shortcut == "proj":     shortcut_operands = (xsrc, w3, b3)   xsrc: (M_pad, Cin_pad)
    Returns (M_pad, C_pad) f32; caller slices off padding.
    """
    m_pad, k_pad = patches.shape
    c_pad = w.shape[1]
    assert m_pad % tile_m == 0
    num_m = m_pad // tile_m

    def full(shape):
        return pl.BlockSpec(shape, lambda p, m: (0, 0))

    in_specs = [
        pl.BlockSpec((tile_m, k_pad), lambda p, m: (m, 0)),
        full((k_pad, c_pad)),
        full((1, c_pad)),
        full((1, c_pad)),
    ]
    operands = [patches, w, gamma, beta]
    if shortcut == "identity":
        (xs,) = shortcut_operands
        in_specs.append(pl.BlockSpec((tile_m, c_pad), lambda p, m: (m, 0)))
        operands.append(xs)
    elif shortcut == "proj":
        xsrc, w3, b3 = shortcut_operands
        in_specs += [
            pl.BlockSpec((tile_m, xsrc.shape[1]), lambda p, m: (m, 0)),
            full(w3.shape),
            full((1, c_pad)),
        ]
        operands += [xsrc, w3, b3]

    kern = functools.partial(_conv_bn_kernel, inv_m=1.0 / float(real_m),
                             relu=relu, shortcut=shortcut)
    return pl.pallas_call(
        kern,
        out_shape=jax.ShapeDtypeStruct((m_pad, c_pad), jnp.float32),
        grid=(2, num_m),
        in_specs=in_specs,
        out_specs=pl.BlockSpec((tile_m, c_pad), lambda p, m: (m, 0)),
        scratch_shapes=[pltpu.VMEM((1, c_pad), jnp.float32),
                        pltpu.VMEM((1, c_pad), jnp.float32)],
        compiler_params=pltpu.CompilerParams(
            dimension_semantics=("arbitrary", "arbitrary")),
    )(*operands)


# ----------------------------------------------------------------------------
# Glue: im2col patch extraction / layout plumbing (plain JAX, outside kernels)
# ----------------------------------------------------------------------------
def im2col(x_nhwc, ksize, stride, padding):
    x_p = jnp.pad(x_nhwc, ((0, 0), (padding, padding), (padding, padding), (0, 0)))
    N, Hp, Wp, C = x_p.shape
    Ho = (Hp - ksize) // stride + 1
    Wo = (Wp - ksize) // stride + 1
    taps = []
    for kh in range(ksize):
        for kw in range(ksize):
            taps.append(x_p[:, kh:kh + stride * Ho:stride, kw:kw + stride * Wo:stride, :])
    p = jnp.stack(taps, axis=3)                     # (N, Ho, Wo, k*k, C)
    return p.reshape(N * Ho * Wo, ksize * ksize * C), (N, Ho, Wo)


def residual_forward(x_nchw, params, *, use_1x1conv, strides, tile_m=256):
    """Forward of d2l Residual: relu(bn2(conv2(relu(bn1(conv1(X))))) + shortcut(X))."""
    x = jnp.transpose(x_nchw, (0, 2, 3, 1)).astype(jnp.float32)   # NCHW -> NHWC
    N, H, W, cin = x.shape
    cout = params["w1"].shape[1]
    c_pad = _round_up(cout, LANE)
    cin_pad = _round_up(cin, LANE)

    def pick_tile(m):
        tm = min(tile_m, _round_up(m, LANE))        # multiple of (8,128) sublane/lane
        return tm, _round_up(m, tm)

    # ---- conv1 (3x3, pad 1, stride `strides`) + bn1 + relu (one fused call) ----
    p1, (N, Ho, Wo) = im2col(x, 3, strides, 1)
    m1 = N * Ho * Wo
    tm1, m1_pad = pick_tile(m1)
    k1_pad = _round_up(p1.shape[1], LANE)
    y1 = conv_bn(
        _pad2d(p1, m1_pad, k1_pad),
        _pad2d(params["w1"], k1_pad, c_pad),
        _pad2d(params["g1"].reshape(1, -1), 1, c_pad),
        _pad2d(params["be1"].reshape(1, -1), 1, c_pad),
        real_m=m1, relu=True, tile_m=tm1)
    y1_img = y1[:m1, :cout].reshape(N, Ho, Wo, cout)

    # ---- conv2 (3x3, pad 1, s1) + bn2 + shortcut + add + relu (one fused call) ----
    p2, _ = im2col(y1_img, 3, 1, 1)
    m2 = N * Ho * Wo
    tm2, m2_pad = pick_tile(m2)
    k2_pad = _round_up(p2.shape[1], LANE)
    p2p = _pad2d(p2, m2_pad, k2_pad)
    w2p = _pad2d(params["w2"], k2_pad, c_pad)
    g2 = _pad2d(params["g2"].reshape(1, -1), 1, c_pad)
    be2 = _pad2d(params["be2"].reshape(1, -1), 1, c_pad)

    if use_1x1conv:
        xsrc = _pad2d(x[:, ::strides, ::strides, :].reshape(m2, cin), m2_pad, cin_pad)
        w3p = _pad2d(params["w3"], cin_pad, c_pad)
        b3p = _pad2d(params["b3"].reshape(1, -1), 1, c_pad)
        y2 = conv_bn(p2p, w2p, g2, be2, real_m=m2, relu=True, tile_m=tm2,
                     shortcut="proj", shortcut_operands=(xsrc, w3p, b3p))
    else:
        xs = _pad2d(x.reshape(m2, cin), m2_pad, c_pad)
        y2 = conv_bn(p2p, w2p, g2, be2, real_m=m2, relu=True, tile_m=tm2,
                     shortcut="identity", shortcut_operands=(xs,))

    out = y2[:m2, :cout].reshape(N, Ho, Wo, cout)
    return jnp.transpose(out, (0, 3, 1, 2))                        # NHWC -> NCHW


# ----------------------------------------------------------------------------
# Deterministic parameter construction + pure-JAX reference for validation
# ----------------------------------------------------------------------------
def make_params(key, cin, cout, use_1x1conv):
    ks = jax.random.split(key, 8)
    p = {
        # weights stored already in im2col matrix form: (kh*kw*Cin, Cout) == HWIO flattened
        "w1": 0.1 * jax.random.normal(ks[0], (3 * 3 * cin, cout), jnp.float32),
        "b1": 0.1 * jax.random.normal(ks[1], (cout,), jnp.float32),
        "w2": 0.1 * jax.random.normal(ks[2], (3 * 3 * cout, cout), jnp.float32),
        "b2": 0.1 * jax.random.normal(ks[3], (cout,), jnp.float32),
        "g1": 1.0 + 0.1 * jax.random.normal(ks[4], (cout,), jnp.float32),
        "be1": 0.1 * jax.random.normal(ks[5], (cout,), jnp.float32),
        "g2": 1.0 + 0.1 * jax.random.normal(ks[6], (cout,), jnp.float32),
        "be2": 0.1 * jax.random.normal(ks[7], (cout,), jnp.float32),
    }
    if use_1x1conv:
        k3a, k3b = jax.random.split(ks[0], 2)
        p["w3"] = 0.1 * jax.random.normal(k3a, (1 * 1 * cin, cout), jnp.float32)
        p["b3"] = 0.1 * jax.random.normal(k3b, (cout,), jnp.float32)
    return p


def _conv_ref(x_nhwc, w_mat, b, ksize, stride, padding):
    cout = w_mat.shape[1]
    cin = w_mat.shape[0] // (ksize * ksize)
    w_hwio = w_mat.reshape(ksize, ksize, cin, cout)
    y = jax.lax.conv_general_dilated(
        x_nhwc, w_hwio, (stride, stride),
        [(padding, padding), (padding, padding)],
        dimension_numbers=("NHWC", "HWIO", "NHWC"))
    return y + b


def _bn_ref(y, gamma, beta):
    m = y.mean(axis=(0, 1, 2), keepdims=True)
    v = ((y - m) ** 2).mean(axis=(0, 1, 2), keepdims=True)
    return (y - m) * jax.lax.rsqrt(v + BN_EPS) * gamma + beta


def residual_ref(x_nchw, params, *, use_1x1conv, strides):
    # Reference keeps the conv biases (the kernel drops them; BN cancels them).
    x = jnp.transpose(x_nchw, (0, 2, 3, 1)).astype(jnp.float32)
    y = jnp.maximum(_bn_ref(_conv_ref(x, params["w1"], params["b1"], 3, strides, 1),
                            params["g1"], params["be1"]), 0.0)
    y = _bn_ref(_conv_ref(y, params["w2"], params["b2"], 3, 1, 1),
                params["g2"], params["be2"])
    sc = _conv_ref(x, params["w3"], params["b3"], 1, strides, 0) if use_1x1conv else x
    return jnp.transpose(jnp.maximum(y + sc, 0.0), (0, 3, 1, 2))


# ----------------------------------------------------------------------------
if __name__ == "__main__":
    key = jax.random.PRNGKey(0)
    kx, kp1, kp2 = jax.random.split(key, 3)

    # PyTorch-style NCHW input: batch=2, channels=4, spatial=16x16
    x = jax.random.normal(kx, (2, 4, 16, 16), jnp.float32)

    # Case 1: Residual(4, 8, use_1x1conv=True, strides=2)  (fused 1x1 projection)
    p1 = make_params(kp1, 4, 8, use_1x1conv=True)
    out1 = residual_forward(x, p1, use_1x1conv=True, strides=2)
    jax.block_until_ready(out1)
    ref1 = residual_ref(x, p1, use_1x1conv=True, strides=2)
    assert out1.shape == (2, 8, 8, 8), out1.shape
    assert jnp.allclose(out1, ref1, atol=1e-4, rtol=1e-4)

    # Case 2: Residual(4, 4) — identity shortcut (exercises multi-tile M grid)
    p2 = make_params(kp2, 4, 4, use_1x1conv=False)
    out2 = residual_forward(x, p2, use_1x1conv=False, strides=1)
    jax.block_until_ready(out2)
    ref2 = residual_ref(x, p2, use_1x1conv=False, strides=1)
    assert out2.shape == (2, 4, 16, 16), out2.shape
    assert jnp.allclose(out2, ref2, atol=1e-4, rtol=1e-4)

    print("KERNEL_OK")
</pallas_src>

<mosaic_0001>
module attributes {stable_mosaic.version = 11 : i64} {
  func.func @_conv_bn_kernel(%arg0: i32, %arg1: i32, %arg2: memref<128x128xf32, #tpu.memory_space<vmem>>, %arg3: memref<128x128xf32, #tpu.memory_space<vmem>>, %arg4: memref<1x128xf32, #tpu.memory_space<vmem>>, %arg5: memref<1x128xf32, #tpu.memory_space<vmem>>, %arg6: memref<128x128xf32, #tpu.memory_space<vmem>>, %arg7: memref<1x128xf32, #tpu.memory_space<vmem>>, %arg8: memref<1x128xf32, #tpu.memory_space<vmem>>) attributes {dimension_semantics = [#tpu.dimension_semantics<arbitrary>, #tpu.dimension_semantics<arbitrary>], iteration_bounds = array<i64: 2, 1>, scalar_prefetch = 0 : i64, scratch_operands = 2 : i64, tpu.core_type = #tpu.core_type<tc>, window_params = [{transform_indices = @transform_0, window_bounds = array<i64: 128, 128>}, {pipeline_mode = #tpu.pipeline_mode<synchronous>, transform_indices = @transform_1, window_bounds = array<i64: 128, 128>}, {pipeline_mode = #tpu.pipeline_mode<synchronous>, transform_indices = @transform_2, window_bounds = array<i64: 1, 128>}, {pipeline_mode = #tpu.pipeline_mode<synchronous>, transform_indices = @transform_3, window_bounds = array<i64: 1, 128>}, {transform_indices = @transform_4, window_bounds = array<i64: 128, 128>}]} {
    %c0_i32 = arith.constant 0 : i32
    %0 = arith.cmpi eq, %arg0, %c0_i32 : i32
    %c0_i32_0 = arith.constant 0 : i32
    %1 = arith.cmpi eq, %arg1, %c0_i32_0 : i32
    %2 = arith.andi %0, %1 : i1
    %3 = arith.extui %2 : i1 to i32
    %c0_i32_1 = arith.constant 0 : i32
    %4 = arith.cmpi ne, %3, %c0_i32_1 : i32
    scf.if %4 {
      %cst_8 = arith.constant 0.000000e+00 : f32
      %14 = vector.broadcast %cst_8 : f32 to vector<1x128xf32>
      %c0_9 = arith.constant 0 : index
      %c0_10 = arith.constant 0 : index
      %15 = vector.load %arg7[%c0_9, %c0_10] : memref<1x128xf32, #tpu.memory_space<vmem>>, vector<1x128xf32>
      tpu.vector_store %arg7[%c0_9, %c0_10], %14 {strides = array<i32>} : memref<1x128xf32, #tpu.memory_space<vmem>>, vector<1x128xf32>,
      %cst_11 = arith.constant 0.000000e+00 : f32
      %16 = vector.broadcast %cst_11 : f32 to vector<1x128xf32>
      %c0_12 = arith.constant 0 : index
      %c0_13 = arith.constant 0 : index
      %17 = vector.load %arg8[%c0_12, %c0_13] : memref<1x128xf32, #tpu.memory_space<vmem>>, vector<1x128xf32>
      tpu.vector_store %arg8[%c0_12, %c0_13], %16 {strides = array<i32>} : memref<1x128xf32, #tpu.memory_space<vmem>>, vector<1x128xf32>,
    } else {
    }
    %c0 = arith.constant 0 : index
    %c0_2 = arith.constant 0 : index
    %5 = vector.load %arg2[%c0, %c0_2] : memref<128x128xf32, #tpu.memory_space<vmem>>, vector<128x128xf32>
    %c0_3 = arith.constant 0 : index
    %c0_4 = arith.constant 0 : index
    %6 = vector.load %arg3[%c0_3, %c0_4] : memref<128x128xf32, #tpu.memory_space<vmem>>, vector<128x128xf32>
    %cst = arith.constant dense<0.000000e+00> : vector<128x128xf32>
    %7 = tpu.matmul %5, %6, %cst {dimension_numbers = #tpu.dot_dimension_numbers<[1], [0], [0], [1], [0, 0, 1, 1], [], []>} : vector<128x128xf32>, vector<128x128xf32>, vector<128x128xf32> -> vector<128x128xf32>
    %c0_i32_5 = arith.constant 0 : i32
    %8 = arith.cmpi eq, %arg0, %c0_i32_5 : i32
    %9 = arith.extui %8 : i1 to i32
    %c0_i32_6 = arith.constant 0 : i32
    %10 = arith.cmpi ne, %9, %c0_i32_6 : i32
    scf.if %10 {
      %c0_8 = arith.constant 0 : index
      %c0_9 = arith.constant 0 : index
      %14 = vector.load %arg7[%c0_8, %c0_9] : memref<1x128xf32, #tpu.memory_space<vmem>>, vector<1x128xf32>
      %cst_10 = arith.constant dense<0.000000e+00> : vector<128xf32>
      %15 = vector.multi_reduction <add>, %7, %cst_10 [0] : vector<128x128xf32> to vector<128xf32>
      %16 = vector.shape_cast %15 : vector<128xf32> to vector<1x128xf32>
      %17 = arith.addf %14, %16 : vector<1x128xf32>
      %c0_11 = arith.constant 0 : index
      %c0_12 = arith.constant 0 : index
      %18 = vector.load %arg7[%c0_11, %c0_12] : memref<1x128xf32, #tpu.memory_space<vmem>>, vector<1x128xf32>
      tpu.vector_store %arg7[%c0_11, %c0_12], %17 {strides = array<i32>} : memref<1x128xf32, #tpu.memory_space<vmem>>, vector<1x128xf32>,
      %c0_13 = arith.constant 0 : index
      %c0_14 = arith.constant 0 : index
      %19 = vector.load %arg8[%c0_13, %c0_14] : memref<1x128xf32, #tpu.memory_space<vmem>>, vector<1x128xf32>
      %20 = arith.mulf %7, %7 : vector<128x128xf32>
      %cst_15 = arith.constant dense<0.000000e+00> : vector<128xf32>
      %21 = vector.multi_reduction <add>, %20, %cst_15 [0] : vector<128x128xf32> to vector<128xf32>
      %22 = vector.shape_cast %21 : vector<128xf32> to vector<1x128xf32>
      %23 = arith.addf %19, %22 : vector<1x128xf32>
      %c0_16 = arith.constant 0 : index
      %c0_17 = arith.constant 0 : index
      %24 = vector.load %arg8[%c0_16, %c0_17] : memref<1x128xf32, #tpu.memory_space<vmem>>, vector<1x128xf32>
      tpu.vector_store %arg8[%c0_16, %c0_17], %23 {strides = array<i32>} : memref<1x128xf32, #tpu.memory_space<vmem>>, vector<1x128xf32>,
    } else {
    }
    %c1_i32 = arith.constant 1 : i32
    %11 = arith.cmpi eq, %arg0, %c1_i32 : i32
    %12 = arith.extui %11 : i1 to i32
    %c0_i32_7 = arith.constant 0 : i32
    %13 = arith.cmpi ne, %12, %c0_i32_7 : i32
    scf.if %13 {
      %c0_8 = arith.constant 0 : index
      %c0_9 = arith.constant 0 : index
      %14 = vector.load %arg7[%c0_8, %c0_9] : memref<1x128xf32, #tpu.memory_space<vmem>>, vector<1x128xf32>
      %cst_10 = arith.constant 7.812500e-03 : f32
      %15 = vector.broadcast %cst_10 : f32 to vector<1x128xf32>
      %16 = arith.mulf %14, %15 : vector<1x128xf32>
      %c0_11 = arith.constant 0 : index
      %c0_12 = arith.constant 0 : index
      %17 = vector.load %arg8[%c0_11, %c0_12] : memref<1x128xf32, #tpu.memory_space<vmem>>, vector<1x128xf32>
      %cst_13 = arith.constant 7.812500e-03 : f32
      %18 = vector.broadcast %cst_13 : f32 to vector<1x128xf32>
      %19 = arith.mulf %17, %18 : vector<1x128xf32>
      %20 = arith.mulf %16, %16 : vector<1x128xf32>
      %21 = arith.subf %19, %20 : vector<1x128xf32>
      %cst_14 = arith.constant 0.000000e+00 : f32
      %22 = vector.broadcast %cst_14 : f32 to vector<1x128xf32>
      %23 = arith.maximumf %21, %22 : vector<1x128xf32>
      %c0_15 = arith.constant 0 : index
      %c0_16 = arith.constant 0 : index
      %24 = vector.load %arg4[%c0_15, %c0_16] : memref<1x128xf32, #tpu.memory_space<vmem>>, vector<1x128xf32>
      %cst_17 = arith.constant 9.99999974E-6 : f32
      %25 = vector.broadcast %cst_17 : f32 to vector<1x128xf32>
      %26 = arith.addf %23, %25 : vector<1x128xf32>
      %27 = math.rsqrt %26 : vector<1x128xf32>
      %28 = arith.mulf %24, %27 : vector<1x128xf32>
      %c0_18 = arith.constant 0 : index
      %c0_19 = arith.constant 0 : index
      %29 = vector.load %arg5[%c0_18, %c0_19] : memref<1x128xf32, #tpu.memory_space<vmem>>, vector<1x128xf32>
      %30 = arith.mulf %16, %28 : vector<1x128xf32>
      %31 = arith.subf %29, %30 : vector<1x128xf32>
      %32 = vector.broadcast %28 : vector<1x128xf32> to vector<128x128xf32>
      %33 = arith.mulf %7, %32 : vector<128x128xf32>
      %34 = vector.broadcast %31 : vector<1x128xf32> to vector<128x128xf32>
      %35 = arith.addf %33, %34 : vector<128x128xf32>
      %cst_20 = arith.constant 0.000000e+00 : f32
      %36 = vector.broadcast %cst_20 : f32 to vector<128x128xf32>
      %37 = arith.maximumf %35, %36 : vector<128x128xf32>
      %c0_21 = arith.constant 0 : index
      %c0_22 = arith.constant 0 : index
      %38 = vector.load %arg6[%c0_21, %c0_22] : memref<128x128xf32, #tpu.memory_space<vmem>>, vector<128x128xf32>
      tpu.vector_store %arg6[%c0_21, %c0_22], %37 {strides = array<i32>} : memref<128x128xf32, #tpu.memory_space<vmem>>, vector<128x128xf32>,
    } else {
    }
    return
  }
  func.func @transform_0(%arg0: i32, %arg1: i32) -> (i32, i32) {
    %c0_i32 = arith.constant 0 : i32
    %c0_i32_0 = arith.constant 0 : i32
    return %arg1, %c0_i32 : i32, i32
  }
  func.func @transform_1(%arg0: i32, %arg1: i32) -> (i32, i32) {
    %c0_i32 = arith.constant 0 : i32
    %c0_i32_0 = arith.constant 0 : i32
    %c0_i32_1 = arith.constant 0 : i32
    return %c0_i32, %c0_i32_0 : i32, i32
  }
  func.func @transform_2(%arg0: i32, %arg1: i32) -> (i32, i32) {
    %c0_i32 = arith.constant 0 : i32
    %c0_i32_0 = arith.constant 0 : i32
    %c0_i32_1 = arith.constant 0 : i32
    return %c0_i32, %c0_i32_0 : i32, i32
  }
  func.func @transform_3(%arg0: i32, %arg1: i32) -> (i32, i32) {
    %c0_i32 = arith.constant 0 : i32
    %c0_i32_0 = arith.constant 0 : i32
    %c0_i32_1 = arith.constant 0 : i32
    return %c0_i32, %c0_i32_0 : i32, i32
  }
  func.func @transform_4(%arg0: i32, %arg1: i32) -> (i32, i32) {
    %c0_i32 = arith.constant 0 : i32
    %c0_i32_0 = arith.constant 0 : i32
    return %arg1, %c0_i32 : i32, i32
  }
}

</mosaic_0001>

<llo_original>
// kernel: tpu_custom_call.1
$region0: #{tpu_custom_call.1}
  #allocation0 [shape = 'u32[]', space=smem, size = 0x4, offset = 0x4, fixed_abs, tag = 'smem constant byte address 0x4 - core index']
  #allocation1 [shape = 'u32[72,128]{1,0:T(1,128)}', space=vmem, size = 0x9000, scoped, tag = 'internal scratch']
  #allocation2 [shape = 'f32[1,128]{1,0:T(1,128)}', space=vmem, size = 0x200, scoped, tag = 'scratch operand']
  #allocation3 [shape = 'f32[1,128]{1,0:T(1,128)}', space=vmem, size = 0x200, scoped, tag = 'scratch operand']
  %s0 = inlined_call_operand.hbm [shape: f32[128,128], index: 0, kind: input, shape index: {}]
  %s1 = inlined_call_operand.hbm [shape: f32[128,128], index: 1, kind: input, shape index: {}]
  %s2 = inlined_call_operand.vmem [shape: f32[1,128], index: 2, kind: input, shape index: {}]
  %s3 = inlined_call_operand.vmem [shape: f32[1,128], index: 3, kind: input, shape index: {}]
  %s4 = inlined_call_operand.hbm [shape: f32[128,128], index: 4, kind: output, shape index: {}]
  %s5 = sld [smem:[#allocation0]]
  $region69: #{tpu_custom_call.1} parent=0
    _
  %s7 = ssub.s32 1, %s5
  %s8 = scalar_select 0, %s7, %s5
  $region1: #{tpu_custom_call.1} parent=0
    #allocation4 [shape = 'u8[65536]{0}', space=vmem, size = 0x10000, scoped, tag = 'input window, operand 0, single buffered']
    #allocation5 [shape = 's32[2]{0}', space=sflag, size = 0x8, scoped, tag = 'scoped memory for tpu_custom_call.1']
    #allocation6 [shape = 's32[2]{0}', space=sflag, size = 0x8, scoped, tag = 'scoped memory for tpu_custom_call.1']
    #allocation7 [shape = 'u8[65536]{0}', space=vmem, size = 0x10000, scoped, tag = 'input window, operand 1, single buffered']
    #allocation8 [shape = 's32[1]{0}', space=sflag, size = 0x4, scoped, tag = 'scoped memory for tpu_custom_call.1']
    #allocation9 [shape = 'u8[65536]{0}', space=vmem, size = 0x10000, scoped, tag = 'output window, operand 0, single buffered']
    %9 = vsyncpa [#allocation5], 0
    %10 = vsyncpa [#allocation8], 0
    %11 = vsyncpa [#allocation6], 0
    loop: start=0, step=1, limit=4
    $region2: #{tpu_custom_call.1} parent=1 // loop_pre_header
      _
    $region3: #{tpu_custom_call.1} parent=1 // loop_header
      %s13 = sphi 0, %s17
      %p14 = scmp.ge.s32.totalorder %s13, 4
      %s20 = sphi 0, %s32
      %s21 = sphi 0, %s28
      %s22 = sphi 0, %s20
      %s23 = sphi 0, %s21
      %s24 = sphi 0, %s22
      %s25 = sphi 0, %s23
      %s35 = sphi 0, %s37
      %s38 = sphi 0, %s35
      %s39 = sphi 0, %s38
      %s55 = sphi 0, %s39
      %s59 = sphi 0, %s59
      %s61 = sphi 0, %s59
      %s62 = sphi 0, %s61
      %s76 = sphi 0, %s62
      %s80 = sphi 0, %s80
      %s82 = sphi 0, %s80
      %s83 = sphi 0, %s82
      %s97 = sphi 0, %s83
      %s101 = sphi 0, %s101
      %s103 = sphi 0, %s101
      %s104 = sphi 0, %s103
      %s118 = sphi 0, %s104
      %s124 = sphi 0, %s126
      %s127 = sphi 0, %s124
      %s128 = sphi 0, %s127
      %s144 = sphi 0, %s128
    $region4: #{tpu_custom_call.1} parent=1 // loop_header_branch
      %16 = sbr.rel (%p14) target = $region8
    $region5: #{tpu_custom_call.1} parent=1 // loop_body
      %s18 = ssub.s32 %s13, 1
      %s19 = ssub.s32 %s13, 2
      %s26 = sadd.s32 1, %s21
      %p27 = scmp.ge.s32.totalorder %s26, 1
      %s28 = scalar_select %p27, 0, %s26
      %s29 = sadd.s32 1, %s20
      %s30 = scalar_select %p27, %s29, %s20
      %p31 = scmp.ge.s32.totalorder %s30, 2
      %s32 = scalar_select %p31, 0, %s30
      %s33 = ssub.s32 %s21, %s28
      %p34 = scmp.eq.s32.totalorder %s33, 0
      %s36 = sadd.s32 %s35, 1
      %s37 = scalar_select %p34, %s35, %s36
      %p40 = pneg %p34
      %p41 = scmp.eq.s32.totalorder %s13, 1
      %p42 = por %p40, %p41
      %p43 = scmp.ne.s32.totalorder %s35, %s38
      %p44 = scmp.eq.s32.totalorder %s13, 0
      %p45 = por %p43, %p44
      %p46 = scmp.ne.s32.totalorder %s35, %s38
      %p47 = scmp.eq.s32.totalorder %s18, 1
      %p48 = por %p46, %p47
      %p49 = scmp.ne.s32.totalorder %s38, %s39
      %p50 = scmp.eq.s32.totalorder %s18, 0
      %p51 = por %p49, %p50
      %p52 = scmp.ne.s32.totalorder %s38, %s39
      %p53 = scmp.eq.s32.totalorder %s19, 1
      %p54 = por %p52, %p53
      %p56 = scmp.ne.s32.totalorder %s39, %s55
      %p57 = scmp.eq.s32.totalorder %s19, 0
      %p58 = por %p56, %p57
      %s60 = sadd.s32 %s59, 1
      %p63 = scmp.eq.s32.totalorder %s13, 1
      %p64 = scmp.ne.s32.totalorder %s59, %s61
      %p65 = scmp.eq.s32.totalorder %s13, 0
      %p66 = por %p64, %p65
      %p67 = scmp.ne.s32.totalorder %s59, %s61
      %p68 = scmp.eq.s32.totalorder %s18, 1
      %p69 = por %p67, %p68
      %p70 = scmp.ne.s32.totalorder %s61, %s62
      %p71 = scmp.eq.s32.totalorder %s18, 0
      %p72 = por %p70, %p71
      %p73 = scmp.ne.s32.totalorder %s61, %s62
      %p74 = scmp.eq.s32.totalorder %s19, 1
      %p75 = por %p73, %p74
      %p77 = scmp.ne.s32.totalorder %s62, %s76
      %p78 = scmp.eq.s32.totalorder %s19, 0
      %p79 = por %p77, %p78
      %s81 = sadd.s32 %s80, 1
      %p84 = scmp.eq.s32.totalorder %s13, 1
      %p85 = scmp.ne.s32.totalorder %s80, %s82
      %p86 = scmp.eq.s32.totalorder %s13, 0
      %p87 = por %p85, %p86
      %p88 = scmp.ne.s32.totalorder %s80, %s82
      %p89 = scmp.eq.s32.totalorder %s18, 1
      %p90 = por %p88, %p89
      %p91 = scmp.ne.s32.totalorder %s82, %s83
      %p92 = scmp.eq.s32.totalorder %s18, 0
      %p93 = por %p91, %p92
      %p94 = scmp.ne.s32.totalorder %s82, %s83
      %p95 = scmp.eq.s32.totalorder %s19, 1
      %p96 = por %p94, %p95
      %p98 = scmp.ne.s32.totalorder %s83, %s97
      %p99 = scmp.eq.s32.totalorder %s19, 0
      %p100 = por %p98, %p99
      %s102 = sadd.s32 %s101, 1
      %p105 = scmp.eq.s32.totalorder %s13, 1
      %p106 = scmp.ne.s32.totalorder %s101, %s103
      %p107 = scmp.eq.s32.totalorder %s13, 0
      %p108 = por %p106, %p107
      %p109 = scmp.ne.s32.totalorder %s101, %s103
      %p110 = scmp.eq.s32.totalorder %s18, 1
      %p111 = por %p109, %p110
      %p112 = scmp.ne.s32.totalorder %s103, %s104
      %p113 = scmp.eq.s32.totalorder %s18, 0
      %p114 = por %p112, %p113
      %p115 = scmp.ne.s32.totalorder %s103, %s104
      %p116 = scmp.eq.s32.totalorder %s19, 1
      %p117 = por %p115, %p116
      %p119 = scmp.ne.s32.totalorder %s104, %s118
      %p120 = scmp.eq.s32.totalorder %s19, 0
      %p121 = por %p119, %p120
      %s122 = ssub.s32 %s21, %s28
      %p123 = scmp.eq.s32.totalorder %s122, 0
      %s125 = sadd.s32 %s124, 1
      %s126 = scalar_select %p123, %s124, %s125
      %p129 = pneg %p123
      %p130 = scmp.eq.s32.totalorder %s13, 1
      %p131 = por %p129, %p130
      %p132 = scmp.ne.s32.totalorder %s124, %s127
      %p133 = scmp.eq.s32.totalorder %s13, 0
      %p134 = por %p132, %p133
      %p135 = scmp.ne.s32.totalorder %s124, %s127
      %p136 = scmp.eq.s32.totalorder %s18, 1
      %p137 = por %p135, %p136
      %p138 = scmp.ne.s32.totalorder %s127, %s128
      %p139 = scmp.eq.s32.totalorder %s18, 0
      %p140 = por %p138, %p139
      %p141 = scmp.ne.s32.totalorder %s127, %s128
      %p142 = scmp.eq.s32.totalorder %s19, 1
      %p143 = por %p141, %p142
      %p145 = scmp.ne.s32.totalorder %s128, %s144
      %p146 = scmp.eq.s32.totalorder %s19, 0
      %p147 = por %p145, %p146
      %p148 = scmp.le.s32.totalorder 1, %s13
      %p149 = scmp.lt.s32.totalorder %s13, 3
      %p150 = pnand %p148, %p149
      %p151 = pneg %p150
      // Predicated region
      $region9: #{tpu_custom_call.1} parent=5 // pred_check
        _
      $region10: #{tpu_custom_call.1} parent=5 // pred_check_branch
        %153 = sbr.rel (%p150) target = $region12
      $region11: #{tpu_custom_call.1} parent=5 // pred_region
        %s154 = ssub.s32 %s13, 1
        // Predicated region
        $region13: #{tpu_custom_call.1} parent=11 // pred_check
          %p155 = pneg %p51
        $region14: #{tpu_custom_call.1} parent=11 // pred_check_branch
          %157 = sbr.rel (%p155) target = $region16
        $region15: #{tpu_custom_call.1} parent=11 // pred_region
          %s158 = smul.u32 16, %s23
          %160 = vsyncadd [#allocation5], 0
          %s161 = smul.addr %s158, 8
          %s162 = scalar_lea.hbm %s0, %s161
          %s163 = sshll.u32 %s162, 4
          %s164 = int_to_ptr.hbm [resolvable:$true] %s163
          %s165 = sshll.u32 [#allocation4], 4
          %s166 = int_to_ptr.vmem [resolvable:$true] %s165
          %171 = dma.hbm_to_vmem [thread:$0]  %s164, 2048, %s166, [#allocation5], 128, 128, 8
        $region16: #{tpu_custom_call.1} parent=11 // pred_fallthru
          _
        // Predicated region
        $region17: #{tpu_custom_call.1} parent=11 // pred_check
          %p172 = pneg %p72
        $region18: #{tpu_custom_call.1} parent=11 // pred_check_branch
          %174 = sbr.rel (%p172) target = $region20
        $region19: #{tpu_custom_call.1} parent=11 // pred_region
          %176 = vsyncadd [#allocation8], 0
          %s177 = sshll.u32 %s1, 4
          %s178 = int_to_ptr.hbm [resolvable:$true] %s177
          %s179 = sshll.u32 [#allocation7], 4
          %s180 = int_to_ptr.vmem [resolvable:$true] %s179
          %185 = dma.hbm_to_vmem [thread:$0]  %s178, 2048, %s180, [#allocation8], 128, 128, 8
        $region20: #{tpu_custom_call.1} parent=11 // pred_fallthru
          _
        // Predicated region
        $region21: #{tpu_custom_call.1} parent=11 // pred_check
          %p186 = pneg %p93
        $region22: #{tpu_custom_call.1} parent=11 // pred_check_branch
          %188 = sbr.rel (%p186) target = $region24
        $region23: #{tpu_custom_call.1} parent=11 // pred_region
          _
        $region24: #{tpu_custom_call.1} parent=11 // pred_fallthru
          _
        // Predicated region
        $region25: #{tpu_custom_call.1} parent=11 // pred_check
          %p189 = pneg %p114
        $region26: #{tpu_custom_call.1} parent=11 // pred_check_branch
          %191 = sbr.rel (%p189) target = $region28
        $region27: #{tpu_custom_call.1} parent=11 // pred_region
          _
        $region28: #{tpu_custom_call.1} parent=11 // pred_fallthru
          _
      $region12: #{tpu_custom_call.1} parent=5 // pred_fallthru
        _
      %p192 = scmp.lt.s32.totalorder %s13, 2
      // Predicated region
      $region29: #{tpu_custom_call.1} parent=5 // pred_check
        %p193 = pneg %p192
      $region30: #{tpu_custom_call.1} parent=5 // pred_check_branch
        %195 = sbr.rel (%p193) target = $region32
      $region31: #{tpu_custom_call.1} parent=5 // pred_region
        _
      $region32: #{tpu_custom_call.1} parent=5 // pred_fallthru
        _
      %p196 = scmp.le.s32.totalorder 1, %s13
      %p197 = scmp.lt.s32.totalorder %s13, 3
      %p198 = pnand %p196, %p197
      %p199 = pneg %p198
      // Predicated region
      $region33: #{tpu_custom_call.1} parent=5 // pred_check
        _
      $region34: #{tpu_custom_call.1} parent=5 // pred_check_branch
        %201 = sbr.rel (%p198) target = $region36
      $region35: #{tpu_custom_call.1} parent=5 // pred_region
        %s202 = ssub.s32 %s13, 1
        // Predicated region
        $region37: #{tpu_custom_call.1} parent=35 // pred_check
          %p203 = pneg %p51
        $region38: #{tpu_custom_call.1} parent=35 // pred_check_branch
          %205 = sbr.rel (%p203) target = $region40
        $region39: #{tpu_custom_call.1} parent=35 // pred_region
          %207 = dma.done [#allocation5], 2048
        $region40: #{tpu_custom_call.1} parent=35 // pred_fallthru
          _
        // Predicated region
        $region41: #{tpu_custom_call.1} parent=35 // pred_check
          %p208 = pneg %p72
        $region42: #{tpu_custom_call.1} parent=35 // pred_check_branch
          %210 = sbr.rel (%p208) target = $region44
        $region43: #{tpu_custom_call.1} parent=35 // pred_region
          %212 = dma.done [#allocation8], 2048
        $region44: #{tpu_custom_call.1} parent=35 // pred_fallthru
          _
        %p213 = pneg %p51
        %p214 = pneg %p48
        %p215 = pneg %p72
        %p216 = pneg %p69
        %p217 = pneg %p93
        %p218 = pneg %p90
        %p219 = pneg %p114
        %p220 = pneg %p111
        %p221 = pneg %p140
        %p222 = pneg %p137
        %s223 = smul.u32 16, %s23
        %s224 = smul.u32 16, %s23
        %p225 = scmp.eq.s32.totalorder %s22, 0
        %p226 = scmp.eq.s32.totalorder %s23, 0
        %p227 = pnand %p225, %p226
        %p228 = pneg %p227
        // Predicated region
        $region45: #{tpu_custom_call.1} parent=35 // pred_check
          _
        $region46: #{tpu_custom_call.1} parent=35 // pred_check_branch
          %230 = sbr.rel (%p227) target = $region48
        $region47: #{tpu_custom_call.1} parent=35 // pred_region
          %231 = vst [vmem:[#allocation2] sm:$0x1] 0.0
          %232 = vst [vmem:[#allocation3] sm:$0x1] 0.0
        $region48: #{tpu_custom_call.1} parent=35 // pred_fallthru
          _
        %v233 = vld [vmem:[#allocation4] sm:$0xff]
        %v234 = vld [vmem:[#allocation4 + $0x8] sm:$0xff]
        %v235 = vld [vmem:[#allocation4 + $0x10] sm:$0xff]
        %v236 = vld [vmem:[#allocation4 + $0x18] sm:$0xff]
        %v237 = vld [vmem:[#allocation4 + $0x20] sm:$0xff]
        %v238 = vld [vmem:[#allocation4 + $0x28] sm:$0xff]
        %v239 = vld [vmem:[#allocation4 + $0x30] sm:$0xff]
        %v240 = vld [vmem:[#allocation4 + $0x38] sm:$0xff]
        %v241 = vld [vmem:[#allocation4 + $0x40] sm:$0xff]
        %v242 = vld [vmem:[#allocation4 + $0x48] sm:$0xff]
        %v243 = vld [vmem:[#allocation4 + $0x50] sm:$0xff]
        %v244 = vld [vmem:[#allocation4 + $0x58] sm:$0xff]
        %v245 = vld [vmem:[#allocation4 + $0x60] sm:$0xff]
        %v246 = vld [vmem:[#allocation4 + $0x68] sm:$0xff]
        %v247 = vld [vmem:[#allocation4 + $0x70] sm:$0xff]
        %v248 = vld [vmem:[#allocation4 + $0x78] sm:$0xff]
        %v249 = vld [vmem:[#allocation7] sm:$0xff]
        %v250 = vld [vmem:[#allocation7 + $0x8] sm:$0xff]
        %v251 = vld [vmem:[#allocation7 + $0x10] sm:$0xff]
        %v252 = vld [vmem:[#allocation7 + $0x18] sm:$0xff]
        %v253 = vld [vmem:[#allocation7 + $0x20] sm:$0xff]
        %v254 = vld [vmem:[#allocation7 + $0x28] sm:$0xff]
        %v255 = vld [vmem:[#allocation7 + $0x30] sm:$0xff]
        %v256 = vld [vmem:[#allocation7 + $0x38] sm:$0xff]
        %v257 = vld [vmem:[#allocation7 + $0x40] sm:$0xff]
        %v258 = vld [vmem:[#allocation7 + $0x48] sm:$0xff]
        %v259 = vld [vmem:[#allocation7 + $0x50] sm:$0xff]
        %v260 = vld [vmem:[#allocation7 + $0x58] sm:$0xff]
        %v261 = vld [vmem:[#allocation7 + $0x60] sm:$0xff]
        %v262 = vld [vmem:[#allocation7 + $0x68] sm:$0xff]
        %v263 = vld [vmem:[#allocation7 + $0x70] sm:$0xff]
        %v264 = vld [vmem:[#allocation7 + $0x78] sm:$0xff]
        %265 = vmatpush.msra.mxu0 %v264
        %266 = vmatpush.msra.mxu0 %v263
        %267 = vmatpush.msra.mxu0 %v262
        %268 = vmatpush.msra.mxu0 %v261
        %269 = vmatpush.msra.mxu0 %v260
        %270 = vmatpush.msra.mxu0 %v259
        %271 = vmatpush.msra.mxu0 %v258
        %272 = vmatpush.msra.mxu0 %v257
        %273 = vmatpush.msra.mxu0 %v256
        %274 = vmatpush.msra.mxu0 %v255
        %275 = vmatpush.msra.mxu0 %v254
        %276 = vmatpush.msra.mxu0 %v253
        %277 = vmatpush.msra.mxu0 %v252
        %278 = vmatpush.msra.mxu0 %v251
        %279 = vmatpush.msra.mxu0 %v250
        %280 = vmatpush.msra.mxu0 %v249
        %281 = vmatmul.f32.gmra.mxu0 %v233
        %v282 = vpop.f32.mrf.mxu0
        %v283 = vadd.f32 0.0, %v282
        %284 = vmatmul.f32.gmra.mxu0 %v234
        %v285 = vpop.f32.mrf.mxu0
        %v286 = vadd.f32 0.0, %v285
        %287 = vmatmul.f32.gmra.mxu0 %v235
        %v288 = vpop.f32.mrf.mxu0
        %v289 = vadd.f32 0.0, %v288
        %290 = vmatmul.f32.gmra.mxu0 %v236
        %v291 = vpop.f32.mrf.mxu0
        %v292 = vadd.f32 0.0, %v291
        %293 = vmatmul.f32.gmra.mxu0 %v237
        %v294 = vpop.f32.mrf.mxu0
        %v295 = vadd.f32 0.0, %v294
        %296 = vmatmul.f32.gmra.mxu0 %v238
        %v297 = vpop.f32.mrf.mxu0
        %v298 = vadd.f32 0.0, %v297
        %299 = vmatmul.f32.gmra.mxu0 %v239
        %v300 = vpop.f32.mrf.mxu0
        %v301 = vadd.f32 0.0, %v300
        %302 = vmatmul.f32.gmra.mxu0 %v240
        %v303 = vpop.f32.mrf.mxu0
        %v304 = vadd.f32 0.0, %v303
        %305 = vmatmul.f32.gmra.mxu0 %v241
        %v306 = vpop.f32.mrf.mxu0
        %v307 = vadd.f32 0.0, %v306
        %308 = vmatmul.f32.gmra.mxu0 %v242
        %v309 = vpop.f32.mrf.mxu0
        %v310 = vadd.f32 0.0, %v309
        %311 = vmatmul.f32.gmra.mxu0 %v243
        %v312 = vpop.f32.mrf.mxu0
        %v313 = vadd.f32 0.0, %v312
        %314 = vmatmul.f32.gmra.mxu0 %v244
        %v315 = vpop.f32.mrf.mxu0
        %v316 = vadd.f32 0.0, %v315
        %317 = vmatmul.f32.gmra.mxu0 %v245
        %v318 = vpop.f32.mrf.mxu0
        %v319 = vadd.f32 0.0, %v318
        %320 = vmatmul.f32.gmra.mxu0 %v246
        %v321 = vpop.f32.mrf.mxu0
        %v322 = vadd.f32 0.0, %v321
        %323 = vmatmul.f32.gmra.mxu0 %v247
        %v324 = vpop.f32.mrf.mxu0
        %v325 = vadd.f32 0.0, %v324
        %326 = vmatmul.f32.gmra.mxu0 %v248
        %v327 = vpop.f32.mrf.mxu0
        %v328 = vadd.f32 0.0, %v327
        %329 = vdwg.mxu0
        // Predicated region
        $region49: #{tpu_custom_call.1} parent=35 // pred_check
          %p330 = pneg %p225
        $region50: #{tpu_custom_call.1} parent=35 // pred_check_branch
          %332 = sbr.rel (%p330) target = $region52
        $region51: #{tpu_custom_call.1} parent=35 // pred_region
          %v333 = vld [vmem:[#allocation2] sm:$0x1]
          %v334 = vadd.f32 %v283, %v286
          %v335 = vadd.f32 %v334, %v289
          %v336 = vadd.f32 %v335, %v292
          %v337 = vadd.f32 %v336, %v295
          %v338 = vadd.f32 %v337, %v298
          %v339 = vadd.f32 %v338, %v301
          %v340 = vadd.f32 %v339, %v304
          %v341 = vadd.f32 %v340, %v307
          %v342 = vadd.f32 %v341, %v310
          %v343 = vadd.f32 %v342, %v313
          %v344 = vadd.f32 %v343, %v316
          %v345 = vadd.f32 %v344, %v319
          %v346 = vadd.f32 %v345, %v322
          %v347 = vadd.f32 %v346, %v325
          %v348 = vadd.f32 %v347, %v328
          %v349 = vrot.slane %v348, 4
          %v350 = vadd.f32 %v348, %v349
          %v351 = vrot.slane %v350, 2
          %v352 = vadd.f32 %v350, %v351
          %v353 = vrot.slane %v352, 1
          %v354 = vadd.f32 %v352, %v353
          %v355 = vadd.f32 %v333, %v354
          %356 = vst [vmem:[#allocation2] sm:$0x1] %v355
          %v357 = vld [vmem:[#allocation3] sm:$0x1]
          %v358 = vmul.f32 %v283, %v283
          %v359 = vmul.f32 %v286, %v286
          %v360 = vmul.f32 %v289, %v289
          %v361 = vmul.f32 %v292, %v292
          %v362 = vmul.f32 %v295, %v295
          %v363 = vmul.f32 %v298, %v298
          %v364 = vmul.f32 %v301, %v301
          %v365 = vmul.f32 %v304, %v304
          %v366 = vmul.f32 %v307, %v307
          %v367 = vmul.f32 %v310, %v310
          %v368 = vmul.f32 %v313, %v313
          %v369 = vmul.f32 %v316, %v316
          %v370 = vmul.f32 %v319, %v319
          %v371 = vmul.f32 %v322, %v322
          %v372 = vmul.f32 %v325, %v325
          %v373 = vmul.f32 %v328, %v328
          %v374 = vadd.f32 %v358, %v359
          %v375 = vadd.f32 %v374, %v360
          %v376 = vadd.f32 %v375, %v361
          %v377 = vadd.f32 %v376, %v362
          %v378 = vadd.f32 %v377, %v363
          %v379 = vadd.f32 %v378, %v364
          %v380 = vadd.f32 %v379, %v365
          %v381 = vadd.f32 %v380, %v366
          %v382 = vadd.f32 %v381, %v367
          %v383 = vadd.f32 %v382, %v368
          %v384 = vadd.f32 %v383, %v369
          %v385 = vadd.f32 %v384, %v370
          %v386 = vadd.f32 %v385, %v371
          %v387 = vadd.f32 %v386, %v372
          %v388 = vadd.f32 %v387, %v373
          %v389 = vrot.slane %v388, 4
          %v390 = vadd.f32 %v388, %v389
          %v391 = vrot.slane %v390, 2
          %v392 = vadd.f32 %v390, %v391
          %v393 = vrot.slane %v392, 1
          %v394 = vadd.f32 %v392, %v393
          %v395 = vadd.f32 %v357, %v394
          %396 = vst [vmem:[#allocation3] sm:$0x1] %v395
        $region52: #{tpu_custom_call.1} parent=35 // pred_fallthru
          _
        %p397 = scmp.eq.s32.totalorder %s22, 1
        // Predicated region
        $region53: #{tpu_custom_call.1} parent=35 // pred_check
          %p398 = pneg %p397
        $region54: #{tpu_custom_call.1} parent=35 // pred_check_branch
          %400 = sbr.rel (%p398) target = $region56
        $region55: #{tpu_custom_call.1} parent=35 // pred_region
          %v401 = vld [vmem:[#allocation2] sm:$0x1]
          %v402 = vmul.f32 %v401, 0.0078125
          %v403 = vld [vmem:[#allocation3] sm:$0x1]
          %v404 = vmul.f32 %v403, 0.0078125
          %v405 = vmul.f32 %v402, %v402
          %v406 = vsub.f32 %v404, %v405
          %v407 = vmax.f32 %v406, 0.0
          %v408 = vld [vmem:[%s2] sm:$0x1]
          %v409 = vadd.f32 %v407, 1e-05
          %v410 = vrsqrt.pop %v409
          %v411 = vmul.f32 %v410, %v409
          %v412 = vmul.f32 %v411, %v410
          %v413 = vmul.f32 0.5, %v412
          %v414 = vsub.f32 1.5, %v413
          %v415 = vmul.f32 %v410, %v414
          %vm416 = vweird.f32 %v409
          %vm417 = vweird.f32 %v410
          %vm418 = vmor %vm416, %vm417
          %v419 = vsel %vm418, %v410, %v415
          %v420 = vmul.f32 %v408, %v419
          %v421 = vld [vmem:[%s3] sm:$0x1]
          %v422 = vmul.f32 %v402, %v420
          %v423 = vsub.f32 %v421, %v422
          %v425 = vperm.slane %v420, 0
          %v427 = vmul.f32 %v283, %v425
          %v428 = vmul.f32 %v286, %v425
          %v429 = vmul.f32 %v289, %v425
          %v430 = vmul.f32 %v292, %v425
          %v431 = vmul.f32 %v295, %v425
          %v432 = vmul.f32 %v298, %v425
          %v433 = vmul.f32 %v301, %v425
          %v434 = vmul.f32 %v304, %v425
          %v435 = vmul.f32 %v307, %v425
          %v436 = vmul.f32 %v310, %v425
          %v437 = vmul.f32 %v313, %v425
          %v438 = vmul.f32 %v316, %v425
          %v439 = vmul.f32 %v319, %v425
          %v440 = vmul.f32 %v322, %v425
          %v441 = vmul.f32 %v325, %v425
          %v442 = vmul.f32 %v328, %v425
          %v444 = vperm.slane %v423, 0
          %v446 = vadd.f32 %v427, %v444
          %v447 = vadd.f32 %v428, %v444
          %v448 = vadd.f32 %v429, %v444
          %v449 = vadd.f32 %v430, %v444
          %v450 = vadd.f32 %v431, %v444
          %v451 = vadd.f32 %v432, %v444
          %v452 = vadd.f32 %v433, %v444
          %v453 = vadd.f32 %v434, %v444
          %v454 = vadd.f32 %v435, %v444
          %v455 = vadd.f32 %v436, %v444
          %v456 = vadd.f32 %v437, %v444
          %v457 = vadd.f32 %v438, %v444
          %v458 = vadd.f32 %v439, %v444
          %v459 = vadd.f32 %v440, %v444
          %v460 = vadd.f32 %v441, %v444
          %v461 = vadd.f32 %v442, %v444
          %v462 = vmax.f32 %v446, 0.0
          %v463 = vmax.f32 %v447, 0.0
          %v464 = vmax.f32 %v448, 0.0
          %v465 = vmax.f32 %v449, 0.0
          %v466 = vmax.f32 %v450, 0.0
          %v467 = vmax.f32 %v451, 0.0
          %v468 = vmax.f32 %v452, 0.0
          %v469 = vmax.f32 %v453, 0.0
          %v470 = vmax.f32 %v454, 0.0
          %v471 = vmax.f32 %v455, 0.0
          %v472 = vmax.f32 %v456, 0.0
          %v473 = vmax.f32 %v457, 0.0
          %v474 = vmax.f32 %v458, 0.0
          %v475 = vmax.f32 %v459, 0.0
          %v476 = vmax.f32 %v460, 0.0
          %v477 = vmax.f32 %v461, 0.0
          %478 = vst [vmem:[#allocation9] sm:$0xff] %v462
          %479 = vst [vmem:[#allocation9 + $0x8] sm:$0xff] %v463
          %480 = vst [vmem:[#allocation9 + $0x10] sm:$0xff] %v464
          %481 = vst [vmem:[#allocation9 + $0x18] sm:$0xff] %v465
          %482 = vst [vmem:[#allocation9 + $0x20] sm:$0xff] %v466
          %483 = vst [vmem:[#allocation9 + $0x28] sm:$0xff] %v467
          %484 = vst [vmem:[#allocation9 + $0x30] sm:$0xff] %v468
          %485 = vst [vmem:[#allocation9 + $0x38] sm:$0xff] %v469
          %486 = vst [vmem:[#allocation9 + $0x40] sm:$0xff] %v470
          %487 = vst [vmem:[#allocation9 + $0x48] sm:$0xff] %v471
          %488 = vst [vmem:[#allocation9 + $0x50] sm:$0xff] %v472
          %489 = vst [vmem:[#allocation9 + $0x58] sm:$0xff] %v473
          %490 = vst [vmem:[#allocation9 + $0x60] sm:$0xff] %v474
          %491 = vst [vmem:[#allocation9 + $0x68] sm:$0xff] %v475
          %492 = vst [vmem:[#allocation9 + $0x70] sm:$0xff] %v476
          %493 = vst [vmem:[#allocation9 + $0x78] sm:$0xff] %v477
        $region56: #{tpu_custom_call.1} parent=35 // pred_fallthru
          _
        // Predicated region
        $region57: #{tpu_custom_call.1} parent=35 // pred_check
          %p494 = pneg %p137
        $region58: #{tpu_custom_call.1} parent=35 // pred_check_branch
          %496 = sbr.rel (%p494) target = $region60
        $region59: #{tpu_custom_call.1} parent=35 // pred_region
          %s497 = smul.u32 16, %s23
          %499 = vsyncadd [#allocation6], 0
          %s500 = smul.addr %s497, 8
          %s501 = scalar_lea.hbm %s4, %s500
          %s502 = sshll.u32 [#allocation9], 4
          %s503 = int_to_ptr.vmem [resolvable:$true] %s502
          %s504 = sshll.u32 %s501, 4
          %s505 = int_to_ptr.hbm [resolvable:$true] %s504
          %510 = dma.vmem_to_hbm [thread:$0]  %s503, 2048, %s505, [#allocation6], 128, 128, 8
        $region60: #{tpu_custom_call.1} parent=35 // pred_fallthru
          _
        // Predicated region
        $region61: #{tpu_custom_call.1} parent=35 // pred_check
          %p511 = pneg %p137
        $region62: #{tpu_custom_call.1} parent=35 // pred_check_branch
          %513 = sbr.rel (%p511) target = $region64
        $region63: #{tpu_custom_call.1} parent=35 // pred_region
          %515 = dma.done [#allocation6], 2048
        $region64: #{tpu_custom_call.1} parent=35 // pred_fallthru
          _
      $region36: #{tpu_custom_call.1} parent=5 // pred_fallthru
        _
      %p516 = scmp.le.s32.totalorder 2, %s13
      // Predicated region
      $region65: #{tpu_custom_call.1} parent=5 // pred_check
        %p517 = pneg %p516
      $region66: #{tpu_custom_call.1} parent=5 // pred_check_branch
        %519 = sbr.rel (%p517) target = $region68
      $region67: #{tpu_custom_call.1} parent=5 // pred_region
        %s520 = ssub.s32 %s13, 2
      $region68: #{tpu_custom_call.1} parent=5 // pred_fallthru
        _
    $region6: #{tpu_custom_call.1} parent=1 // loop_footer
      %s17 = sadd.s32 1, %s13
    $region7: #{tpu_custom_call.1} parent=1 // loop_footer_branch
      %12 = sbr.rel target = $region3
    $region8: #{tpu_custom_call.1} parent=1 // loop_exit
      _
    %521 = vsyncpa [#allocation5], 1
    %s522 = scalar_lea.sflag [#allocation5], 1
    %523 = vsyncpa %s522, 1
    %524 = vsyncpa [#allocation8], 1
    %525 = vsyncpa [#allocation6], 1
    %s526 = scalar_lea.sflag [#allocation6], 1
    %527 = vsyncpa %s526, 1

</llo_original>
